<compile_context>
chip_gen: v7x
topology: tpu7x:2x2x1
jax: 0.10.0
libtpu: 0.0.40
codegen_flags: <defaults>
</compile_context>

<pallas_src>
import functools

import jax
import jax.numpy as jnp
from jax.experimental import pallas as pl
from jax.experimental.pallas import tpu as pltpu


def _fused_cls_ce_kernel(out1_ref, out2_ref, labels_ref, feats_ref,
                         posw_ref, clsw_ref, sel_ref, selt_ref,   # inputs
                         o_ref,                                    # (1,1,1+2F) partials
                         num1_ref, num2_ref, den2_ref,             # VMEM accumulators
                         *, batch, need_mask):
    """Grid = (core, batch_tile).  Accumulate CE numerators/denominators.

    out1_ref : (TB, C1)     main-head logits (original dtype, upcast here)
    out2_ref : (TB, F*C2)   packed per-feature logits (original dtype)
    labels_ref: (TB, 1) i32 main-head targets
    feats_ref : (TB, F) i32 per-feature targets
    posw_ref  : (1, F*C2)   per-feature class weights, packed
    clsw_ref  : (1, F*C2)   class index within each feature segment (as f32)
    sel_ref   : (F*C2, F)   block-diagonal 0/1 segment-sum selector
    selt_ref  : (F, F*C2)   its transpose (per-feature -> per-lane expansion)
    o_ref     : (1, 1, 1+2F) per-core partials [num1, num2[F], den2[F]]
    """
    c = pl.program_id(0)          # core-parallel axis
    j = pl.program_id(1)          # batch-tile reduction axis
    spc = pl.num_programs(1)      # tiles per core
    tb, c1 = out1_ref.shape
    F = num2_ref.shape[-1]

    @pl.when(j == 0)
    def _init():
        num1_ref[...] = jnp.zeros_like(num1_ref)
        num2_ref[...] = jnp.zeros_like(num2_ref)
        den2_ref[...] = jnp.zeros_like(den2_ref)

    # Full f32 upcast kept for numerical parity (mandatory on v5e; on v6e/v7x
    # the bf16 compare path could stay in bf16 -- left as a follow-up).
    x1 = out1_ref[...].astype(jnp.float32)      # (TB, C1)
    x2 = out2_ref[...].astype(jnp.float32)      # (TB, F*C2)
    y1 = labels_ref[...]                        # (TB, 1) i32
    feats = feats_ref[...]                      # (TB, F) i32

    if need_mask:
        # Only the tiny label tensors are masked: a row with target -1 never
        # matches any class, so garbage logits on OOB rows contribute exactly 0.
        tile = c * spc + j
        rows = jax.lax.broadcasted_iota(jnp.int32, (tb, 1), 0)
        valid = (tile * tb + rows) < batch
        y1 = jnp.where(valid, y1, -1)
        feats = jnp.where(valid, feats, -1)

    # ---------------- main head: unweighted CE (denominator == batch) ----------------
    m1 = jnp.max(x1, axis=-1, keepdims=True)
    lse1 = m1 + jnp.log(jnp.sum(jnp.exp(x1 - m1), axis=-1, keepdims=True))   # (TB,1)
    cls1 = jax.lax.broadcasted_iota(jnp.int32, (tb, c1), 1)
    contrib1 = jnp.where(cls1 == y1, lse1 - x1, 0.0)                         # fused select
    num1_ref[...] += jnp.sum(jnp.sum(contrib1, axis=-1, keepdims=True),
                             axis=0, keepdims=True)                          # (1,1)

    # ------------- feature heads: all F heads processed lane-dense at once -------------
    w2 = posw_ref[...]            # (1, F*C2)
    clsw = clsw_ref[...]          # (1, F*C2)
    sel = sel_ref[...]            # (F*C2, F)
    selt = selt_ref[...]          # (F, F*C2)

    # Per-row global max as the lse stabilizer (single full-width lane reduce).
    # NOTE: if head logit ranges differ by >~85 the tiny head's sum-exp can
    # underflow; compute per-feature maxes in that (unusual) regime.
    m2 = jnp.max(x2, axis=-1, keepdims=True)                                  # (TB,1)
    e2 = jnp.exp(x2 - m2)                                                     # (TB, F*C2)
    sumexp = jnp.dot(e2, sel, preferred_element_type=jnp.float32)             # (TB, F)  MXU
    lse_f = m2 + jnp.log(sumexp)                                              # (TB, F)
    lse_full = jnp.dot(lse_f, selt, preferred_element_type=jnp.float32)       # (TB, F*C2) MXU
    y_full = jnp.dot(feats.astype(jnp.float32), selt,
                     preferred_element_type=jnp.float32)                      # (TB, F*C2) MXU
    match = y_full == clsw                                                    # exact small-int cmp
    contrib_n = jnp.where(match, w2 * (lse_full - x2), 0.0)                   # fused select
    contrib_d = jnp.where(match, w2, 0.0)
    num_t = jnp.dot(contrib_n, sel, preferred_element_type=jnp.float32)       # (TB, F) MXU
    den_t = jnp.dot(contrib_d, sel, preferred_element_type=jnp.float32)       # (TB, F) MXU
    num2_ref[...] += jnp.sum(num_t, axis=0, keepdims=True)                    # (1, F)
    den2_ref[...] += jnp.sum(den_t, axis=0, keepdims=True)                    # (1, F)

    # -------- per-core finalize: emit partial sums (combined in the wrapper) --------
    @pl.when(j == spc - 1)
    def _finalize():
        o_ref[:, :, 0:1] = num1_ref[...][None]
        o_ref[:, :, 1:1 + F] = num2_ref[...][None]
        o_ref[:, :, 1 + F:1 + 2 * F] = den2_ref[...][None]


class ClsCELossPallas:
    """JAX/Pallas port of `cls_ce_loss` (single fused streaming kernel)."""

    def __init__(self, pos_weight, weight, reduction="mean",
                 *, vmem_budget_bytes=20 * 1024 * 1024, max_tile_rows=None):
        pw = jnp.asarray(pos_weight, dtype=jnp.float32)            # (F, C2)
        self.F, self.C2 = pw.shape
        F, C2 = self.F, self.C2
        W = F * C2
        self.pos_weight_packed = pw.reshape(1, W)
        # class index within each feature segment (f32 for exact small-int compare)
        self.cls_within = jnp.tile(jnp.arange(C2, dtype=jnp.float32), F).reshape(1, W)
        # block-diagonal 0/1 selector: SEL[f*C2+c, f] = 1
        seg = (jnp.arange(W)[:, None] // C2) == jnp.arange(F)[None, :]
        self.sel = seg.astype(jnp.float32)                         # (W, F)
        self.selt = jnp.transpose(self.sel)                        # (F, W)
        self.inv_w = 1.0 / jnp.asarray(weight, jnp.float32)        # (F,)
        self.inv_w_sum = jnp.sum(self.inv_w)
        self.reduction = reduction
        self.vmem_budget_bytes = vmem_budget_bytes
        self.max_tile_rows = max_tile_rows

    def _choose_tb(self, B, C1, itemsize1, itemsize2):
        """Batch tile sized from bytes (double-buffered inputs + f32 temps)."""
        W = self.F * self.C2
        row_in = C1 * itemsize1 + W * itemsize2 + 4 * (1 + self.F)
        row_tmp = 4 * (2 * C1 + 4 * W + 4 * self.F)   # in-kernel f32 temporaries
        row_bytes = 2 * row_in + row_tmp               # 2x: input double-buffering
        tb = max(8, self.vmem_budget_bytes // max(row_bytes, 1))
        if self.max_tile_rows is not None:
            tb = min(tb, self.max_tile_rows)
        tb = min(tb, 8192)                             # diminishing returns past this
        if tb >= B:
            return B
        return max(8, (tb // 8) * 8)

    def __call__(self, outputs, labels, features):
        out1, out2 = outputs
        if out1.ndim > 2:                              # mimic torch .squeeze()
            out1 = out1.reshape(out1.shape[0], -1)
        B, C1 = out1.shape
        F, C2 = self.F, self.C2
        W = F * C2
        assert out2.shape == (B, W), (out2.shape, (B, W))

        labels2d = labels.astype(jnp.int32).reshape(B, 1)
        feats = features.astype(jnp.int32).reshape(B, F)

        TB = self._choose_tb(B, C1, jnp.dtype(out1.dtype).itemsize,
                             jnp.dtype(out2.dtype).itemsize)
        n_tiles = (B + TB - 1) // TB
        ncore = 2 if n_tiles >= 2 else 1               # both TCs on v7x; serial elsewhere
        spc = (n_tiles + ncore - 1) // ncore           # tiles per core
        need_mask = (B % TB != 0) or (ncore * spc != n_tiles)

        last_tile = n_tiles - 1

        def row_map(c, j):
            # Clamp duplicated (beyond-range) tiles to the last real tile; the
            # in-kernel label mask zeroes their contribution.
            return (jnp.minimum(c * spc + j, last_tile), 0)

        kernel = functools.partial(_fused_cls_ce_kernel, batch=B, need_mask=need_mask)

        nout = 1 + 2 * F
        out = pl.pallas_call(
            kernel,
            out_shape=jax.ShapeDtypeStruct((ncore, 1, nout), jnp.float32),
            grid=(ncore, spc),
            in_specs=[
                pl.BlockSpec((TB, C1), row_map),                 # out1 (original dtype)
                pl.BlockSpec((TB, W), row_map),                  # out2 (original dtype, no reshape)
                pl.BlockSpec((TB, 1), row_map),                  # labels
                pl.BlockSpec((TB, F), row_map),                  # features
                pl.BlockSpec((1, W), lambda c, j: (0, 0)),       # pos_weight packed
                pl.BlockSpec((1, W), lambda c, j: (0, 0)),       # class-within-segment
                pl.BlockSpec((W, F), lambda c, j: (0, 0)),       # segment-sum selector
                pl.BlockSpec((F, W), lambda c, j: (0, 0)),       # selector transpose
            ],
            out_specs=pl.BlockSpec((1, 1, nout), lambda c, j: (c, 0, 0)),
            scratch_shapes=[
                pltpu.VMEM((1, 1), jnp.float32),    # main-head numerator
                pltpu.VMEM((1, F), jnp.float32),    # per-feature numerators
                pltpu.VMEM((1, F), jnp.float32),    # per-feature denominators
            ],
            compiler_params=pltpu.CompilerParams(
                dimension_semantics=("parallel", "arbitrary"),
                vmem_limit_bytes=48 * 1024 * 1024,
            ),
        )(out1, out2, labels2d, feats,
          self.pos_weight_packed, self.cls_within, self.sel, self.selt)

        # Tiny cross-core combine + final weighted average (a handful of scalars).
        parts = jnp.sum(out.reshape(ncore, nout), axis=0)
        num1 = parts[0]
        num2 = parts[1:1 + F]
        den2 = parts[1 + F:1 + 2 * F]
        bce = num1 / jnp.float32(B)
        # NOTE: if a feature's summed class weights over the batch are zero this
        # is NaN/Inf -- same behavior as torch's weighted CrossEntropyLoss.
        final = jnp.sum((num2 / den2) * self.inv_w) / self.inv_w_sum
        if self.reduction == "sum":
            result = bce + final
        elif self.reduction == "mean":
            result = (bce + final) * 0.5
        elif self.reduction == "weight":
            result = 0.4 * bce + 0.6 * final
        else:
            raise NotImplementedError(self.reduction)
        return result, bce, final


def _ref_weighted_ce(logits, labels, w):
    """Pure-JAX reference matching torch.nn.CrossEntropyLoss(weight=w, reduction='mean')."""
    logp = jax.nn.log_softmax(logits.astype(jnp.float32), axis=-1)
    picked = -jnp.take_along_axis(logp, labels[:, None], axis=-1)[:, 0]
    wl = w[labels]
    return jnp.sum(wl * picked) / jnp.sum(wl)


def _check(mod, out1, out2, labels, features, pos_weight, weight, reduction):
    result, bce_loss, final_ce_loss = jax.block_until_ready(
        mod((out1, out2), labels, features))
    F, C2 = len(pos_weight), len(pos_weight[0])
    C1 = out1.shape[-1]
    ref_bce = _ref_weighted_ce(out1, labels, jnp.ones((C1,), jnp.float32))
    ref_feat = jnp.stack([
        _ref_weighted_ce(out2[:, i * C2:(i + 1) * C2], features[:, i],
                         jnp.asarray(pos_weight[i], jnp.float32))
        for i in range(F)
    ])
    inv_w = 1.0 / jnp.asarray(weight, jnp.float32)
    ref_final = jnp.sum(ref_feat * inv_w) / jnp.sum(inv_w)
    if reduction == "sum":
        ref_result = ref_bce + ref_final
    elif reduction == "mean":
        ref_result = (ref_bce + ref_final) / 2
    else:
        ref_result = 0.4 * ref_bce + 0.6 * ref_final
    assert jnp.allclose(bce_loss, ref_bce, atol=1e-5, rtol=1e-4), (bce_loss, ref_bce)
    assert jnp.allclose(final_ce_loss, ref_final, atol=1e-5, rtol=1e-4), (final_ce_loss, ref_final)
    assert jnp.allclose(result, ref_result, atol=1e-5, rtol=1e-4), (result, ref_result)


if __name__ == "__main__":
    key = jax.random.PRNGKey(0)

    # --- Test 1: tiny single-tile case (matches the module's typical small shapes) ---
    B, C1, F, C2 = 8, 4, 3, 4
    k1, k2, k3, k4, k5, k6, k7, k8, k9 = jax.random.split(key, 9)
    out1 = jax.random.normal(k1, (B, C1), jnp.float32)
    out2 = jax.random.normal(k2, (B, F * C2), jnp.float32)
    labels = jax.random.randint(k3, (B,), 0, C1, dtype=jnp.int32)
    features = jax.random.randint(k4, (B, F), 0, C2, dtype=jnp.int32)
    pos_weight = [[1.0, 2.0, 0.5, 1.5],
                  [0.7, 1.3, 1.0, 2.0],
                  [1.0, 1.0, 0.5, 0.5]]
    weight = [1.0, 2.0, 4.0]
    mod = ClsCELossPallas(pos_weight, weight, reduction="mean")
    _check(mod, out1, out2, labels, features, pos_weight, weight, "mean")

    # --- Test 2: multi-tile + ragged tail + dual-core grid axis (forced small tile) ---
    B2, C1b, Fb, C2b = 200, 6, 3, 5
    out1b = jax.random.normal(k5, (B2, C1b), jnp.float32)
    out2b = jax.random.normal(k6, (B2, Fb * C2b), jnp.float32)
    labelsb = jax.random.randint(k7, (B2,), 0, C1b, dtype=jnp.int32)
    featuresb = jax.random.randint(k8, (B2, Fb), 0, C2b, dtype=jnp.int32)
    pos_weight_b = (0.5 + jax.random.uniform(k9, (Fb, C2b), jnp.float32)).tolist()
    weight_b = [1.0, 3.0, 0.5]
    mod_b = ClsCELossPallas(pos_weight_b, weight_b, reduction="weight",
                            max_tile_rows=48)   # force 5 tiles -> ragged + 2-core axis
    _check(mod_b, out1b, out2b, labelsb, featuresb, pos_weight_b, weight_b, "weight")

    print("KERNEL_OK")
</pallas_src>

<mosaic_0001>
module attributes {stable_mosaic.version = 11 : i64} {
  func.func @_fused_cls_ce_kernel(%arg0: i32, %arg1: i32, %arg2: memref<8x4xf32, #tpu.memory_space<vmem>>, %arg3: memref<8x12xf32, #tpu.memory_space<vmem>>, %arg4: memref<8x1xi32, #tpu.memory_space<vmem>>, %arg5: memref<8x3xi32, #tpu.memory_space<vmem>>, %arg6: memref<1x12xf32, #tpu.memory_space<vmem>>, %arg7: memref<1x12xf32, #tpu.memory_space<vmem>>, %arg8: memref<12x3xf32, #tpu.memory_space<vmem>>, %arg9: memref<3x12xf32, #tpu.memory_space<vmem>>, %arg10: memref<1x1x7xf32, #tpu.memory_space<vmem>>, %arg11: memref<1x1xf32, #tpu.memory_space<vmem>>, %arg12: memref<1x3xf32, #tpu.memory_space<vmem>>, %arg13: memref<1x3xf32, #tpu.memory_space<vmem>>) attributes {dimension_semantics = [#tpu.dimension_semantics<parallel>, #tpu.dimension_semantics<arbitrary>], iteration_bounds = array<i64: 1, 1>, scalar_prefetch = 0 : i64, scratch_operands = 3 : i64, tpu.core_type = #tpu.core_type<tc>, window_params = [{transform_indices = @transform_0, window_bounds = array<i64: 8, 4>}, {transform_indices = @transform_1, window_bounds = array<i64: 8, 12>}, {transform_indices = @transform_2, window_bounds = array<i64: 8, 1>}, {transform_indices = @transform_3, window_bounds = array<i64: 8, 3>}, {pipeline_mode = #tpu.pipeline_mode<synchronous>, transform_indices = @transform_4, window_bounds = array<i64: 1, 12>}, {pipeline_mode = #tpu.pipeline_mode<synchronous>, transform_indices = @transform_5, window_bounds = array<i64: 1, 12>}, {pipeline_mode = #tpu.pipeline_mode<synchronous>, transform_indices = @transform_6, window_bounds = array<i64: 12, 3>}, {pipeline_mode = #tpu.pipeline_mode<synchronous>, transform_indices = @transform_7, window_bounds = array<i64: 3, 12>}, {transform_indices = @transform_8, window_bounds = array<i64: 1, 1, 7>}]} {
    %c0_i32 = arith.constant 0 : i32
    %0 = arith.cmpi eq, %arg1, %c0_i32 : i32
    %1 = arith.extui %0 : i1 to i32
    %c0_i32_0 = arith.constant 0 : i32
    %2 = arith.cmpi ne, %1, %c0_i32_0 : i32
    scf.if %2 {
      %cst_44 = arith.constant 0.000000e+00 : f32
      %72 = vector.broadcast %cst_44 : f32 to vector<1x1xf32>
      %c0_45 = arith.constant 0 : index
      %c0_46 = arith.constant 0 : index
      %73 = vector.load %arg11[%c0_45, %c0_46] : memref<1x1xf32, #tpu.memory_space<vmem>>, vector<1x1xf32>
      tpu.vector_store %arg11[%c0_45, %c0_46], %72 {strides = array<i32>} : memref<1x1xf32, #tpu.memory_space<vmem>>, vector<1x1xf32>,
      %cst_47 = arith.constant 0.000000e+00 : f32
      %74 = vector.broadcast %cst_47 : f32 to vector<1x3xf32>
      %c0_48 = arith.constant 0 : index
      %c0_49 = arith.constant 0 : index
      %75 = vector.load %arg12[%c0_48, %c0_49] : memref<1x3xf32, #tpu.memory_space<vmem>>, vector<1x3xf32>
      tpu.vector_store %arg12[%c0_48, %c0_49], %74 {strides = array<i32>} : memref<1x3xf32, #tpu.memory_space<vmem>>, vector<1x3xf32>,
      %cst_50 = arith.constant 0.000000e+00 : f32
      %76 = vector.broadcast %cst_50 : f32 to vector<1x3xf32>
      %c0_51 = arith.constant 0 : index
      %c0_52 = arith.constant 0 : index
      %77 = vector.load %arg13[%c0_51, %c0_52] : memref<1x3xf32, #tpu.memory_space<vmem>>, vector<1x3xf32>
      tpu.vector_store %arg13[%c0_51, %c0_52], %76 {strides = array<i32>} : memref<1x3xf32, #tpu.memory_space<vmem>>, vector<1x3xf32>,
    } else {
    }
    %c0 = arith.constant 0 : index
    %c0_1 = arith.constant 0 : index
    %3 = vector.load %arg2[%c0, %c0_1] : memref<8x4xf32, #tpu.memory_space<vmem>>, vector<8x4xf32>
    %c0_2 = arith.constant 0 : index
    %c0_3 = arith.constant 0 : index
    %4 = vector.load %arg3[%c0_2, %c0_3] : memref<8x12xf32, #tpu.memory_space<vmem>>, vector<8x12xf32>
    %c0_4 = arith.constant 0 : index
    %c0_5 = arith.constant 0 : index
    %5 = vector.load %arg4[%c0_4, %c0_5] : memref<8x1xi32, #tpu.memory_space<vmem>>, vector<8x1xi32>
    %c0_6 = arith.constant 0 : index
    %c0_7 = arith.constant 0 : index
    %6 = vector.load %arg5[%c0_6, %c0_7] : memref<8x3xi32, #tpu.memory_space<vmem>>, vector<8x3xi32>
    %cst = arith.constant dense<0xFF800000> : vector<8xf32>
    %7 = vector.multi_reduction <maximumf>, %3, %cst [1] : vector<8x4xf32> to vector<8xf32>
    %8 = vector.shape_cast %7 : vector<8xf32> to vector<8x1xf32>
    %9 = vector.broadcast %8 : vector<8x1xf32> to vector<8x4xf32>
    %10 = arith.subf %3, %9 : vector<8x4xf32>
    %11 = math.exp %10 : vector<8x4xf32>
    %cst_8 = arith.constant dense<0.000000e+00> : vector<8xf32>
    %12 = vector.multi_reduction <add>, %11, %cst_8 [1] : vector<8x4xf32> to vector<8xf32>
    %13 = vector.shape_cast %12 : vector<8xf32> to vector<8x1xf32>
    %14 = math.log %13 : vector<8x1xf32>
    %15 = arith.addf %8, %14 : vector<8x1xf32>
    %16 = tpu.iota {dimensions = array<i32: 1>} : vector<8x4xi32>
    %17 = vector.broadcast %5 : vector<8x1xi32> to vector<8x4xi32>
    %18 = arith.cmpi eq, %16, %17 : vector<8x4xi32>
    %19 = vector.broadcast %15 : vector<8x1xf32> to vector<8x4xf32>
    %20 = arith.subf %19, %3 : vector<8x4xf32>
    %cst_9 = arith.constant 0.000000e+00 : f32
    %21 = vector.broadcast %cst_9 : f32 to vector<8x4xf32>
    %22 = arith.select %18, %20, %21 : vector<8x4xi1>, vector<8x4xf32>
    %c0_10 = arith.constant 0 : index
    %c0_11 = arith.constant 0 : index
    %23 = vector.load %arg11[%c0_10, %c0_11] : memref<1x1xf32, #tpu.memory_space<vmem>>, vector<1x1xf32>
    %cst_12 = arith.constant dense<0.000000e+00> : vector<8xf32>
    %24 = vector.multi_reduction <add>, %22, %cst_12 [1] : vector<8x4xf32> to vector<8xf32>
    %25 = vector.shape_cast %24 : vector<8xf32> to vector<8x1xf32>
    %cst_13 = arith.constant dense<0.000000e+00> : vector<1xf32>
    %26 = vector.multi_reduction <add>, %25, %cst_13 [0] : vector<8x1xf32> to vector<1xf32>
    %27 = vector.shape_cast %26 : vector<1xf32> to vector<1x1xf32>
    %28 = arith.addf %23, %27 : vector<1x1xf32>
    %c0_14 = arith.constant 0 : index
    %c0_15 = arith.constant 0 : index
    %29 = vector.load %arg11[%c0_14, %c0_15] : memref<1x1xf32, #tpu.memory_space<vmem>>, vector<1x1xf32>
    tpu.vector_store %arg11[%c0_14, %c0_15], %28 {strides = array<i32>} : memref<1x1xf32, #tpu.memory_space<vmem>>, vector<1x1xf32>,
    %c0_16 = arith.constant 0 : index
    %c0_17 = arith.constant 0 : index
    %30 = vector.load %arg6[%c0_16, %c0_17] : memref<1x12xf32, #tpu.memory_space<vmem>>, vector<1x12xf32>
    %c0_18 = arith.constant 0 : index
    %c0_19 = arith.constant 0 : index
    %31 = vector.load %arg7[%c0_18, %c0_19] : memref<1x12xf32, #tpu.memory_space<vmem>>, vector<1x12xf32>
    %c0_20 = arith.constant 0 : index
    %c0_21 = arith.constant 0 : index
    %32 = vector.load %arg8[%c0_20, %c0_21] : memref<12x3xf32, #tpu.memory_space<vmem>>, vector<12x3xf32>
    %c0_22 = arith.constant 0 : index
    %c0_23 = arith.constant 0 : index
    %33 = vector.load %arg9[%c0_22, %c0_23] : memref<3x12xf32, #tpu.memory_space<vmem>>, vector<3x12xf32>
    %cst_24 = arith.constant dense<0xFF800000> : vector<8xf32>
    %34 = vector.multi_reduction <maximumf>, %4, %cst_24 [1] : vector<8x12xf32> to vector<8xf32>
    %35 = vector.shape_cast %34 : vector<8xf32> to vector<8x1xf32>
    %36 = vector.broadcast %35 : vector<8x1xf32> to vector<8x12xf32>
    %37 = arith.subf %4, %36 : vector<8x12xf32>
    %38 = math.exp %37 : vector<8x12xf32>
    %cst_25 = arith.constant dense<0.000000e+00> : vector<8x3xf32>
    %39 = tpu.matmul %38, %32, %cst_25 {dimension_numbers = #tpu.dot_dimension_numbers<[1], [0], [0], [1], [0, 0, 1, 1], [], []>} : vector<8x12xf32>, vector<12x3xf32>, vector<8x3xf32> -> vector<8x3xf32>
    %40 = math.log %39 : vector<8x3xf32>
    %41 = vector.broadcast %35 : vector<8x1xf32> to vector<8x3xf32>
    %42 = arith.addf %41, %40 : vector<8x3xf32>
    %cst_26 = arith.constant dense<0.000000e+00> : vector<8x12xf32>
    %43 = tpu.matmul %42, %33, %cst_26 {dimension_numbers = #tpu.dot_dimension_numbers<[1], [0], [0], [1], [0, 0, 1, 1], [], []>} : vector<8x3xf32>, vector<3x12xf32>, vector<8x12xf32> -> vector<8x12xf32>
    %44 = arith.sitofp %6 : vector<8x3xi32> to vector<8x3xf32>
    %cst_27 = arith.constant dense<0.000000e+00> : vector<8x12xf32>
    %45 = tpu.matmul %44, %33, %cst_27 {dimension_numbers = #tpu.dot_dimension_numbers<[1], [0], [0], [1], [0, 0, 1, 1], [], []>} : vector<8x3xf32>, vector<3x12xf32>, vector<8x12xf32> -> vector<8x12xf32>
    %46 = vector.broadcast %31 : vector<1x12xf32> to vector<8x12xf32>
    %47 = arith.cmpf oeq, %45, %46 : vector<8x12xf32>
    %48 = arith.subf %43, %4 : vector<8x12xf32>
    %49 = vector.broadcast %30 : vector<1x12xf32> to vector<8x12xf32>
    %50 = arith.mulf %49, %48 : vector<8x12xf32>
    %cst_28 = arith.constant 0.000000e+00 : f32
    %51 = vector.broadcast %cst_28 : f32 to vector<8x12xf32>
    %52 = arith.select %47, %50, %51 : vector<8x12xi1>, vector<8x12xf32>
    %cst_29 = arith.constant 0.000000e+00 : f32
    %53 = vector.shape_cast %30 : vector<1x12xf32> to vector<1x12xf32>
    %54 = vector.broadcast %53 : vector<1x12xf32> to vector<8x12xf32>
    %55 = vector.broadcast %cst_29 : f32 to vector<8x12xf32>
    %56 = arith.select %47, %54, %55 : vector<8x12xi1>, vector<8x12xf32>
    %cst_30 = arith.constant dense<0.000000e+00> : vector<8x3xf32>
    %57 = tpu.matmul %52, %32, %cst_30 {dimension_numbers = #tpu.dot_dimension_numbers<[1], [0], [0], [1], [0, 0, 1, 1], [], []>} : vector<8x12xf32>, vector<12x3xf32>, vector<8x3xf32> -> vector<8x3xf32>
    %cst_31 = arith.constant dense<0.000000e+00> : vector<8x3xf32>
    %58 = tpu.matmul %56, %32, %cst_31 {dimension_numbers = #tpu.dot_dimension_numbers<[1], [0], [0], [1], [0, 0, 1, 1], [], []>} : vector<8x12xf32>, vector<12x3xf32>, vector<8x3xf32> -> vector<8x3xf32>
    %c0_32 = arith.constant 0 : index
    %c0_33 = arith.constant 0 : index
    %59 = vector.load %arg12[%c0_32, %c0_33] : memref<1x3xf32, #tpu.memory_space<vmem>>, vector<1x3xf32>
    %cst_34 = arith.constant dense<0.000000e+00> : vector<3xf32>
    %60 = vector.multi_reduction <add>, %57, %cst_34 [0] : vector<8x3xf32> to vector<3xf32>
    %61 = vector.shape_cast %60 : vector<3xf32> to vector<1x3xf32>
    %62 = arith.addf %59, %61 : vector<1x3xf32>
    %c0_35 = arith.constant 0 : index
    %c0_36 = arith.constant 0 : index
    %63 = vector.load %arg12[%c0_35, %c0_36] : memref<1x3xf32, #tpu.memory_space<vmem>>, vector<1x3xf32>
    tpu.vector_store %arg12[%c0_35, %c0_36], %62 {strides = array<i32>} : memref<1x3xf32, #tpu.memory_space<vmem>>, vector<1x3xf32>,
    %c0_37 = arith.constant 0 : index
    %c0_38 = arith.constant 0 : index
    %64 = vector.load %arg13[%c0_37, %c0_38] : memref<1x3xf32, #tpu.memory_space<vmem>>, vector<1x3xf32>
    %cst_39 = arith.constant dense<0.000000e+00> : vector<3xf32>
    %65 = vector.multi_reduction <add>, %58, %cst_39 [0] : vector<8x3xf32> to vector<3xf32>
    %66 = vector.shape_cast %65 : vector<3xf32> to vector<1x3xf32>
    %67 = arith.addf %64, %66 : vector<1x3xf32>
    %c0_40 = arith.constant 0 : index
    %c0_41 = arith.constant 0 : index
    %68 = vector.load %arg13[%c0_40, %c0_41] : memref<1x3xf32, #tpu.memory_space<vmem>>, vector<1x3xf32>
    tpu.vector_store %arg13[%c0_40, %c0_41], %67 {strides = array<i32>} : memref<1x3xf32, #tpu.memory_space<vmem>>, vector<1x3xf32>,
    %c0_i32_42 = arith.constant 0 : i32
    %69 = arith.cmpi eq, %arg1, %c0_i32_42 : i32
    %70 = arith.extui %69 : i1 to i32
    %c0_i32_43 = arith.constant 0 : i32
    %71 = arith.cmpi ne, %70, %c0_i32_43 : i32
    scf.if %71 {
      %c0_44 = arith.constant 0 : index
      %c0_45 = arith.constant 0 : index
      %72 = vector.load %arg11[%c0_44, %c0_45] : memref<1x1xf32, #tpu.memory_space<vmem>>, vector<1x1xf32>
      %73 = vector.shape_cast %72 : vector<1x1xf32> to vector<1x1x1xf32>
      %c0_46 = arith.constant 0 : index
      %c0_47 = arith.constant 0 : index
      %c0_48 = arith.constant 0 : index
      %74 = vector.load %arg10[%c0_46, %c0_47, %c0_48] : memref<1x1x7xf32, #tpu.memory_space<vmem>>, vector<1x1x1xf32>
      tpu.vector_store %arg10[%c0_46, %c0_47, %c0_48], %73 {strides = array<i32>} : memref<1x1x7xf32, #tpu.memory_space<vmem>>, vector<1x1x1xf32>,
      %c0_49 = arith.constant 0 : index
      %c0_50 = arith.constant 0 : index
      %75 = vector.load %arg12[%c0_49, %c0_50] : memref<1x3xf32, #tpu.memory_space<vmem>>, vector<1x3xf32>
      %76 = vector.shape_cast %75 : vector<1x3xf32> to vector<1x1x3xf32>
      %c0_51 = arith.constant 0 : index
      %c0_52 = arith.constant 0 : index
      %c1 = arith.constant 1 : index
      %77 = vector.load %arg10[%c0_51, %c0_52, %c1] : memref<1x1x7xf32, #tpu.memory_space<vmem>>, vector<1x1x3xf32>
      tpu.vector_store %arg10[%c0_51, %c0_52, %c1], %76 {strides = array<i32>} : memref<1x1x7xf32, #tpu.memory_space<vmem>>, vector<1x1x3xf32>,
      %c0_53 = arith.constant 0 : index
      %c0_54 = arith.constant 0 : index
      %78 = vector.load %arg13[%c0_53, %c0_54] : memref<1x3xf32, #tpu.memory_space<vmem>>, vector<1x3xf32>
      %79 = vector.shape_cast %78 : vector<1x3xf32> to vector<1x1x3xf32>
      %c0_55 = arith.constant 0 : index
      %c0_56 = arith.constant 0 : index
      %c4 = arith.constant 4 : index
      %80 = vector.load %arg10[%c0_55, %c0_56, %c4] : memref<1x1x7xf32, #tpu.memory_space<vmem>>, vector<1x1x3xf32>
      tpu.vector_store %arg10[%c0_55, %c0_56, %c4], %79 {strides = array<i32>} : memref<1x1x7xf32, #tpu.memory_space<vmem>>, vector<1x1x3xf32>,
    } else {
    }
    return
  }
  func.func @transform_0(%arg0: i32, %arg1: i32) -> (i32, i32) {
    %c1_i32 = arith.constant 1 : i32
    %0 = arith.muli %arg0, %c1_i32 : i32
    %1 = arith.addi %0, %arg1 : i32
    %c0_i32 = arith.constant 0 : i32
    %2 = arith.minsi %1, %c0_i32 : i32
    %c0_i32_0 = arith.constant 0 : i32
    %c0_i32_1 = arith.constant 0 : i32
    return %2, %c0_i32_0 : i32, i32
  }
  func.func @transform_1(%arg0: i32, %arg1: i32) -> (i32, i32) {
    %c1_i32 = arith.constant 1 : i32
    %0 = arith.muli %arg0, %c1_i32 : i32
    %1 = arith.addi %0, %arg1 : i32
    %c0_i32 = arith.constant 0 : i32
    %2 = arith.minsi %1, %c0_i32 : i32
    %c0_i32_0 = arith.constant 0 : i32
    %c0_i32_1 = arith.constant 0 : i32
    return %2, %c0_i32_0 : i32, i32
  }
  func.func @transform_2(%arg0: i32, %arg1: i32) -> (i32, i32) {
    %c1_i32 = arith.constant 1 : i32
    %0 = arith.muli %arg0, %c1_i32 : i32
    %1 = arith.addi %0, %arg1 : i32
    %c0_i32 = arith.constant 0 : i32
    %2 = arith.minsi %1, %c0_i32 : i32
    %c0_i32_0 = arith.constant 0 : i32
    %c0_i32_1 = arith.constant 0 : i32
    return %2, %c0_i32_0 : i32, i32
  }
  func.func @transform_3(%arg0: i32, %arg1: i32) -> (i32, i32) {
    %c1_i32 = arith.constant 1 : i32
    %0 = arith.muli %arg0, %c1_i32 : i32
    %1 = arith.addi %0, %arg1 : i32
    %c0_i32 = arith.constant 0 : i32
    %2 = arith.minsi %1, %c0_i32 : i32
    %c0_i32_0 = arith.constant 0 : i32
    %c0_i32_1 = arith.constant 0 : i32
    return %2, %c0_i32_0 : i32, i32
  }
  func.func @transform_4(%arg0: i32, %arg1: i32) -> (i32, i32) {
    %c0_i32 = arith.constant 0 : i32
    %c0_i32_0 = arith.constant 0 : i32
    %c0_i32_1 = arith.constant 0 : i32
    return %c0_i32, %c0_i32_0 : i32, i32
  }
  func.func @transform_5(%arg0: i32, %arg1: i32) -> (i32, i32) {
    %c0_i32 = arith.constant 0 : i32
    %c0_i32_0 = arith.constant 0 : i32
    %c0_i32_1 = arith.constant 0 : i32
    return %c0_i32, %c0_i32_0 : i32, i32
  }
  func.func @transform_6(%arg0: i32, %arg1: i32) -> (i32, i32) {
    %c0_i32 = arith.constant 0 : i32
    %c0_i32_0 = arith.constant 0 : i32
    %c0_i32_1 = arith.constant 0 : i32
    return %c0_i32, %c0_i32_0 : i32, i32
  }
  func.func @transform_7(%arg0: i32, %arg1: i32) -> (i32, i32) {
    %c0_i32 = arith.constant 0 : i32
    %c0_i32_0 = arith.constant 0 : i32
    %c0_i32_1 = arith.constant 0 : i32
    return %c0_i32, %c0_i32_0 : i32, i32
  }
  func.func @transform_8(%arg0: i32, %arg1: i32) -> (i32, i32, i32) {
    %c0_i32 = arith.constant 0 : i32
    %c0_i32_0 = arith.constant 0 : i32
    %c0_i32_1 = arith.constant 0 : i32
    return %arg0, %c0_i32, %c0_i32_0 : i32, i32, i32
  }
}

</mosaic_0001>

<llo_original>
// kernel: tpu_custom_call.1
$region0: #{tpu_custom_call.1}
  #allocation0 [shape = 'u32[]', space=smem, size = 0x4, offset = 0x4, fixed_abs, tag = 'smem constant byte address 0x4 - core index']
  #allocation1 [shape = 'u32[144,128]{1,0:T(1,128)}', space=vmem, size = 0x12000, scoped, tag = 'internal scratch']
  #allocation2 [shape = 'f32[1,1]{1,0:T(1,128)}', space=vmem, size = 0x200, scoped, tag = 'scratch operand']
  #allocation3 [shape = 'f32[1,3]{1,0:T(1,128)}', space=vmem, size = 0x200, scoped, tag = 'scratch operand']
  #allocation4 [shape = 'f32[1,3]{1,0:T(1,128)}', space=vmem, size = 0x200, scoped, tag = 'scratch operand']
  %s0 = inlined_call_operand.vmem [shape: f32[8,4], index: 0, kind: input, shape index: {}]
  %s1 = inlined_call_operand.vmem [shape: f32[8,12], index: 1, kind: input, shape index: {}]
  %s2 = inlined_call_operand.vmem [shape: s32[8,1], index: 2, kind: input, shape index: {}]
  %s3 = inlined_call_operand.vmem [shape: s32[8,3], index: 3, kind: input, shape index: {}]
  %s4 = inlined_call_operand.vmem [shape: f32[1,12], index: 4, kind: input, shape index: {}]
  %s5 = inlined_call_operand.vmem [shape: f32[1,12], index: 5, kind: input, shape index: {}]
  %s6 = inlined_call_operand.vmem [shape: f32[12,3], index: 6, kind: input, shape index: {}]
  %s7 = inlined_call_operand.vmem [shape: f32[3,12], index: 7, kind: input, shape index: {}]
  %s8 = inlined_call_operand.hbm [shape: f32[1,1,7], index: 8, kind: output, shape index: {}]
  %s9 = sld [smem:[#allocation0]]
  $region50: #{tpu_custom_call.1} parent=0
    _
  %s11 = ssub.s32 1, %s9
  %s12 = scalar_select 0, %s11, %s9
  $region1: #{tpu_custom_call.1} parent=0
    #allocation5 [shape = 'u8[512]{0}', space=vmem, size = 0x400, scoped, tag = 'output window, operand 0, single buffered']
    #allocation6 [shape = 's32[1]{0}', space=sflag, size = 0x4, scoped, tag = 'scoped memory for tpu_custom_call.1']
    %13 = vsyncpa [#allocation6], 0
    // Predicated region
    $region2: #{tpu_custom_call.1} parent=1 // pred_check
      _
    $region3: #{tpu_custom_call.1} parent=1 // pred_check_branch
      %15 = sbr.rel (0) target = $region5
    $region4: #{tpu_custom_call.1} parent=1 // pred_region
      %s16 = sadd.s32 0, 0
      %p17 = scmp.lt.s32.totalorder %s16, 0
      %s18 = scalar_select %p17, %s16, 0
      %p19 = scmp.lt.s32.totalorder %s18, 0
      %s20 = scalar_select %p19, %s18, 0
      %s21 = smul.addr %s20, 8
      %s22 = scalar_lea.vmem %s0, %s21
      %s23 = sadd.s32 0, 0
      %p24 = scmp.lt.s32.totalorder %s23, 0
      %s25 = scalar_select %p24, %s23, 0
    $region5: #{tpu_custom_call.1} parent=1 // pred_fallthru
      _
    // Predicated region
    $region6: #{tpu_custom_call.1} parent=1 // pred_check
      _
    $region7: #{tpu_custom_call.1} parent=1 // pred_check_branch
      %27 = sbr.rel (0) target = $region9
    $region8: #{tpu_custom_call.1} parent=1 // pred_region
      %s28 = sadd.s32 0, 0
      %p29 = scmp.lt.s32.totalorder %s28, 0
      %s30 = scalar_select %p29, %s28, 0
      %p31 = scmp.lt.s32.totalorder %s30, 0
      %s32 = scalar_select %p31, %s30, 0
      %s33 = smul.addr %s32, 8
      %s34 = scalar_lea.vmem %s1, %s33
      %s35 = sadd.s32 0, 0
      %p36 = scmp.lt.s32.totalorder %s35, 0
      %s37 = scalar_select %p36, %s35, 0
    $region9: #{tpu_custom_call.1} parent=1 // pred_fallthru
      _
    // Predicated region
    $region10: #{tpu_custom_call.1} parent=1 // pred_check
      _
    $region11: #{tpu_custom_call.1} parent=1 // pred_check_branch
      %39 = sbr.rel (0) target = $region13
    $region12: #{tpu_custom_call.1} parent=1 // pred_region
      %s40 = sadd.s32 0, 0
      %p41 = scmp.lt.s32.totalorder %s40, 0
      %s42 = scalar_select %p41, %s40, 0
      %p43 = scmp.lt.s32.totalorder %s42, 0
      %s44 = scalar_select %p43, %s42, 0
      %s45 = smul.addr %s44, 8
      %s46 = scalar_lea.vmem %s2, %s45
      %s47 = sadd.s32 0, 0
      %p48 = scmp.lt.s32.totalorder %s47, 0
      %s49 = scalar_select %p48, %s47, 0
    $region13: #{tpu_custom_call.1} parent=1 // pred_fallthru
      _
    // Predicated region
    $region14: #{tpu_custom_call.1} parent=1 // pred_check
      _
    $region15: #{tpu_custom_call.1} parent=1 // pred_check_branch
      %51 = sbr.rel (0) target = $region17
    $region16: #{tpu_custom_call.1} parent=1 // pred_region
      %s52 = sadd.s32 0, 0
      %p53 = scmp.lt.s32.totalorder %s52, 0
      %s54 = scalar_select %p53, %s52, 0
      %p55 = scmp.lt.s32.totalorder %s54, 0
      %s56 = scalar_select %p55, %s54, 0
      %s57 = smul.addr %s56, 8
      %s58 = scalar_lea.vmem %s3, %s57
      %s59 = sadd.s32 0, 0
      %p60 = scmp.lt.s32.totalorder %s59, 0
      %s61 = scalar_select %p60, %s59, 0
    $region17: #{tpu_custom_call.1} parent=1 // pred_fallthru
      _
    // Predicated region
    $region18: #{tpu_custom_call.1} parent=1 // pred_check
      _
    $region19: #{tpu_custom_call.1} parent=1 // pred_check_branch
      %63 = sbr.rel (0) target = $region21
    $region20: #{tpu_custom_call.1} parent=1 // pred_region
      _
    $region21: #{tpu_custom_call.1} parent=1 // pred_fallthru
      _
    // Predicated region
    $region22: #{tpu_custom_call.1} parent=1 // pred_check
      _
    $region23: #{tpu_custom_call.1} parent=1 // pred_check_branch
      %65 = sbr.rel (0) target = $region25
    $region24: #{tpu_custom_call.1} parent=1 // pred_region
      _
    $region25: #{tpu_custom_call.1} parent=1 // pred_fallthru
      _
    // Predicated region
    $region26: #{tpu_custom_call.1} parent=1 // pred_check
      _
    $region27: #{tpu_custom_call.1} parent=1 // pred_check_branch
      %67 = sbr.rel (0) target = $region29
    $region28: #{tpu_custom_call.1} parent=1 // pred_region
      _
    $region29: #{tpu_custom_call.1} parent=1 // pred_fallthru
      _
    // Predicated region
    $region30: #{tpu_custom_call.1} parent=1 // pred_check
      _
    $region31: #{tpu_custom_call.1} parent=1 // pred_check_branch
      %69 = sbr.rel (0) target = $region33
    $region32: #{tpu_custom_call.1} parent=1 // pred_region
      _
    $region33: #{tpu_custom_call.1} parent=1 // pred_fallthru
      _
    %s70 = sadd.s32 0, 0
    %p71 = scmp.lt.s32.totalorder %s70, 0
    %s72 = scalar_select %p71, %s70, 0
    %p73 = scmp.lt.s32.totalorder %s72, 0
    %s74 = scalar_select %p73, %s72, 0
    %s75 = smul.addr %s74, 8
    %s76 = scalar_lea.vmem %s0, %s75
    %s77 = sadd.s32 0, 0
    %p78 = scmp.lt.s32.totalorder %s77, 0
    %s79 = scalar_select %p78, %s77, 0
    %p80 = scmp.lt.s32.totalorder %s79, 0
    %s81 = scalar_select %p80, %s79, 0
    %s82 = smul.addr %s81, 8
    %s83 = scalar_lea.vmem %s1, %s82
    %s84 = sadd.s32 0, 0
    %p85 = scmp.lt.s32.totalorder %s84, 0
    %s86 = scalar_select %p85, %s84, 0
    %p87 = scmp.lt.s32.totalorder %s86, 0
    %s88 = scalar_select %p87, %s86, 0
    %s89 = smul.addr %s88, 8
    %s90 = scalar_lea.vmem %s2, %s89
    %s91 = sadd.s32 0, 0
    %p92 = scmp.lt.s32.totalorder %s91, 0
    %s93 = scalar_select %p92, %s91, 0
    %p94 = scmp.lt.s32.totalorder %s93, 0
    %s95 = scalar_select %p94, %s93, 0
    %s96 = smul.addr %s95, 8
    %s97 = scalar_lea.vmem %s3, %s96
    %s98 = sadd.s32 0, 0
    %p99 = scmp.lt.s32.totalorder %s98, 0
    %s100 = scalar_select %p99, %s98, 0
    %p101 = scmp.lt.s32.totalorder %s100, 0
    %s102 = scalar_select %p101, %s100, 0
    %s103 = smul.addr %s102, 8
    %s104 = scalar_lea.vmem %s0, %s103
    %s105 = sadd.s32 0, 0
    %p106 = scmp.lt.s32.totalorder %s105, 0
    %s107 = scalar_select %p106, %s105, 0
    %s108 = sadd.s32 0, 0
    %p109 = scmp.lt.s32.totalorder %s108, 0
    %s110 = scalar_select %p109, %s108, 0
    %p111 = scmp.lt.s32.totalorder %s110, 0
    %s112 = scalar_select %p111, %s110, 0
    %s113 = smul.addr %s112, 8
    %s114 = scalar_lea.vmem %s1, %s113
    %s115 = sadd.s32 0, 0
    %p116 = scmp.lt.s32.totalorder %s115, 0
    %s117 = scalar_select %p116, %s115, 0
    %s118 = sadd.s32 0, 0
    %p119 = scmp.lt.s32.totalorder %s118, 0
    %s120 = scalar_select %p119, %s118, 0
    %p121 = scmp.lt.s32.totalorder %s120, 0
    %s122 = scalar_select %p121, %s120, 0
    %s123 = smul.addr %s122, 8
    %s124 = scalar_lea.vmem %s2, %s123
    %s125 = sadd.s32 0, 0
    %p126 = scmp.lt.s32.totalorder %s125, 0
    %s127 = scalar_select %p126, %s125, 0
    %s128 = sadd.s32 0, 0
    %p129 = scmp.lt.s32.totalorder %s128, 0
    %s130 = scalar_select %p129, %s128, 0
    %p131 = scmp.lt.s32.totalorder %s130, 0
    %s132 = scalar_select %p131, %s130, 0
    %s133 = smul.addr %s132, 8
    %s134 = scalar_lea.vmem %s3, %s133
    %s135 = sadd.s32 0, 0
    %p136 = scmp.lt.s32.totalorder %s135, 0
    %s137 = scalar_select %p136, %s135, 0
    %p138 = scmp.eq.s32.totalorder 0, 0
    // Predicated region
    $region34: #{tpu_custom_call.1} parent=1 // pred_check
      %p139 = pneg %p138
    $region35: #{tpu_custom_call.1} parent=1 // pred_check_branch
      %141 = sbr.rel (%p139) target = $region37
    $region36: #{tpu_custom_call.1} parent=1 // pred_region
      %vm142 = vcmask 0
      %143 = vst.msk [vmem:[#allocation2] sm:$0x1] %vm142, 0.0
      %vm144 = vcmask 16384
      %145 = vst.msk [vmem:[#allocation3] sm:$0x1] %vm144, 0.0
      %146 = vst.msk [vmem:[#allocation4] sm:$0x1] %vm144, 0.0
    $region37: #{tpu_custom_call.1} parent=1 // pred_fallthru
      _
    %v147 = vld [vmem:[%s104] sm:$0xff]
    %v148 = vld [vmem:[%s114] sm:$0xff]
    %v149 = vld [vmem:[%s124] sm:$0xff]
    %v150 = vld [vmem:[%s134] sm:$0xff]
    %vm151 = vcmask 31744
    %v152 = vsel %vm151, %v147, -inf
    %153 = vmax.xlane.f32.xlu0 %v152
    %v154 = vpop.xlane.xlu0 %153
    %v155 = vsub.f32 %v147, %v154
    %v156 = vmul.f32 %v155, 1.442695
    %v157 = vpow.pop %v156
    %v158 = vsel %vm151, %v157, 0.0
    %159 = vadd.xlane.f32.xlu0 %v158
    %v160 = vpop.xlane.xlu0 %159
    %v161 = vlog2.pop %v160
    %v162 = vmul.f32 %v161, 0.6931472
    %v163 = vadd.f32 %v154, %v162
    %v164 = vlaneseq
    %v165 = vand.u32 %v164, 127
    %166 = vset.pattern.permute.xlu0 0
    %167 = vperm.xlu0 %166, %v149
    %v168 = vpop.permute.xlu0 %167
    %vm169 = vcmp.eq.s32.totalorder %v165, %v168
    %v170 = vsub.f32 %v163, %v147
    %v171 = vsel %vm169, %v170, 0.0
    %v172 = vld [vmem:[#allocation2] sm:$0x1]
    %v173 = vsel %vm151, %v171, 0.0
    %174 = vadd.xlane.f32.xlu0 %v173
    %v175 = vpop.xlane.xlu0 %174
    %v176 = vrot.slane %v175, 4
    %v177 = vadd.f32 %v175, %v176
    %v178 = vrot.slane %v177, 2
    %v179 = vadd.f32 %v177, %v178
    %v180 = vrot.slane %v179, 1
    %v181 = vadd.f32 %v179, %v180
    %v182 = vadd.f32 %v172, %v181
    %vm183 = vcmask 0
    %184 = vst.msk [vmem:[#allocation2] sm:$0x1] %vm183, %v182
    %v185 = vld [vmem:[%s4] sm:$0x1]
    %v186 = vld [vmem:[%s5] sm:$0x1]
    %v187 = vld [vmem:[%s6] sm:$0xff]
    %v188 = vld [vmem:[%s6 + $0x8] sm:$0xf]
    %v189 = vld [vmem:[%s7] sm:$0x7]
    %vm190 = vcmask 97280
    %v191 = vsel %vm190, %v148, -inf
    %192 = vmax.xlane.f32.xlu0 %v191
    %v193 = vpop.xlane.xlu0 %192
    %v194 = vsub.f32 %v148, %v193
    %v195 = vmul.f32 %v194, 1.442695
    %v196 = vpow.pop %v195
    %v198 = vsel %vm190, %v196, 0
    %vm200 = vcmask 1043456
    %v202 = vsel %vm200, %v188, 0
    %204 = vmatprep.subr.mxu0 0.0
    %205 = vmatpush1.msra.mxu0 %v187
    %206 = vmatprep.subr.mxu0 0.0
    %207 = vmatpush1.msra.mxu0 %v202
    %208 = vmatprep.subr.mxu0 0.0
    %209 = vmatpush1.msra.mxu0 0.0
    %210 = vmatprep.subr.mxu0 0.0
    %211 = vmatpush1.msra.mxu0 0.0
    %212 = vmatprep.subr.mxu0 0.0
    %213 = vmatpush1.msra.mxu0 0.0
    %214 = vmatprep.subr.mxu0 0.0
    %215 = vmatpush1.msra.mxu0 0.0
    %216 = vmatprep.subr.mxu0 0.0
    %217 = vmatpush1.msra.mxu0 0.0
    %218 = vmatprep.subr.mxu0 0.0
    %219 = vmatpush1.msra.mxu0 0.0
    %220 = vmatprep.subr.mxu0 0.0
    %221 = vmatpush1.msra.mxu0 0.0
    %222 = vmatprep.subr.mxu0 0.0
    %223 = vmatpush1.msra.mxu0 0.0
    %224 = vmatprep.subr.mxu0 0.0
    %225 = vmatpush1.msra.mxu0 0.0
    %226 = vmatprep.subr.mxu0 0.0
    %227 = vmatpush1.msra.mxu0 0.0
    %228 = vmatprep.subr.mxu0 0.0
    %229 = vmatpush1.msra.mxu0 0.0
    %230 = vmatprep.subr.mxu0 0.0
    %231 = vmatpush1.msra.mxu0 0.0
    %232 = vmatprep.subr.mxu0 0.0
    %233 = vmatpush1.msra.mxu0 0.0
    %234 = vmatprep.subr.mxu0 0.0
    %235 = vmatpush1.msra.mxu0 0.0
    %236 = vmatprep.subr.mxu0 0.0
    %237 = vmatpush1.msra.mxu0 0.0
    %238 = vmatprep.subr.mxu0 0.0
    %239 = vmatpush1.msra.mxu0 0.0
    %240 = vmatprep.subr.mxu0 0.0
    %241 = vmatpush1.msra.mxu0 0.0
    %242 = vmatprep.subr.mxu0 0.0
    %243 = vmatpush1.msra.mxu0 0.0
    %244 = vmatprep.subr.mxu0 0.0
    %245 = vmatpush1.msra.mxu0 0.0
    %246 = vmatprep.subr.mxu0 0.0
    %247 = vmatpush1.msra.mxu0 0.0
    %248 = vmatprep.subr.mxu0 0.0
    %249 = vmatpush1.msra.mxu0 0.0
    %250 = vmatprep.subr.mxu0 0.0
    %251 = vmatpush1.msra.mxu0 0.0
    %252 = vmatprep.subr.mxu0 0.0
    %253 = vmatpush1.msra.mxu0 0.0
    %254 = vmatprep.subr.mxu0 0.0
    %255 = vmatpush1.msra.mxu0 0.0
    %256 = vmatprep.subr.mxu0 0.0
    %257 = vmatpush1.msra.mxu0 0.0
    %258 = vmatprep.subr.mxu0 0.0
    %259 = vmatpush1.msra.mxu0 0.0
    %260 = vmatprep.subr.mxu0 0.0
    %261 = vmatpush1.msra.mxu0 0.0
    %262 = vmatprep.subr.mxu0 0.0
    %263 = vmatpush1.msra.mxu0 0.0
    %264 = vmatprep.subr.mxu0 0.0
    %265 = vmatpush1.msra.mxu0 0.0
    %266 = vmatprep.subr.mxu0 0.0
    %267 = vmatpush1.msra.mxu0 0.0
    %268 = vmatprep.mubr.f32.mxu0 0.0
    %269 = vmatmul.mubr.f32.gmra.mrb[0].mxu0 %v198
    %v270 = vpop.f32.mrb[0].mxu0
    %v271 = vadd.f32 0.0, %v270
    %v272 = vpop.f32.mrb[0].mxu0
    %273 = vdwg.mxu0
    %v274 = vlog2.pop %v271
    %v275 = vmul.f32 %v274, 0.6931472
    %v276 = vadd.f32 %v193, %v275
    %vm277 = vcmask 23552
    %v279 = vsel %vm277, %v276, 0
    %vm281 = vcmask 1042432
    %v283 = vsel %vm281, %v189, 0
    %285 = vmatprep.subr.mxu0 0.0
    %286 = vmatpush1.msra.mxu0 %v283
    %287 = vmatprep.subr.mxu0 0.0
    %288 = vmatpush1.msra.mxu0 0.0
    %289 = vmatprep.subr.mxu0 0.0
    %290 = vmatpush1.msra.mxu0 0.0
    %291 = vmatprep.subr.mxu0 0.0
    %292 = vmatpush1.msra.mxu0 0.0
    %293 = vmatprep.subr.mxu0 0.0
    %294 = vmatpush1.msra.mxu0 0.0
    %295 = vmatprep.subr.mxu0 0.0
    %296 = vmatpush1.msra.mxu0 0.0
    %297 = vmatprep.subr.mxu0 0.0
    %298 = vmatpush1.msra.mxu0 0.0
    %299 = vmatprep.subr.mxu0 0.0
    %300 = vmatpush1.msra.mxu0 0.0
    %301 = vmatprep.subr.mxu0 0.0
    %302 = vmatpush1.msra.mxu0 0.0
    %303 = vmatprep.subr.mxu0 0.0
    %304 = vmatpush1.msra.mxu0 0.0
    %305 = vmatprep.subr.mxu0 0.0
    %306 = vmatpush1.msra.mxu0 0.0
    %307 = vmatprep.subr.mxu0 0.0
    %308 = vmatpush1.msra.mxu0 0.0
    %309 = vmatprep.subr.mxu0 0.0
    %310 = vmatpush1.msra.mxu0 0.0
    %311 = vmatprep.subr.mxu0 0.0
    %312 = vmatpush1.msra.mxu0 0.0
    %313 = vmatprep.subr.mxu0 0.0
    %314 = vmatpush1.msra.mxu0 0.0
    %315 = vmatprep.subr.mxu0 0.0
    %316 = vmatpush1.msra.mxu0 0.0
    %317 = vmatprep.subr.mxu0 0.0
    %318 = vmatpush1.msra.mxu0 0.0
    %319 = vmatprep.subr.mxu0 0.0
    %320 = vmatpush1.msra.mxu0 0.0
    %321 = vmatprep.subr.mxu0 0.0
    %322 = vmatpush1.msra.mxu0 0.0
    %323 = vmatprep.subr.mxu0 0.0
    %324 = vmatpush1.msra.mxu0 0.0
    %325 = vmatprep.subr.mxu0 0.0
    %326 = vmatpush1.msra.mxu0 0.0
    %327 = vmatprep.subr.mxu0 0.0
    %328 = vmatpush1.msra.mxu0 0.0
    %329 = vmatprep.subr.mxu0 0.0
    %330 = vmatpush1.msra.mxu0 0.0
    %331 = vmatprep.subr.mxu0 0.0
    %332 = vmatpush1.msra.mxu0 0.0
    %333 = vmatprep.subr.mxu0 0.0
    %334 = vmatpush1.msra.mxu0 0.0
    %335 = vmatprep.subr.mxu0 0.0
    %336 = vmatpush1.msra.mxu0 0.0
    %337 = vmatprep.subr.mxu0 0.0
    %338 = vmatpush1.msra.mxu0 0.0
    %339 = vmatprep.subr.mxu0 0.0
    %340 = vmatpush1.msra.mxu0 0.0
    %341 = vmatprep.subr.mxu0 0.0
    %342 = vmatpush1.msra.mxu0 0.0
    %343 = vmatprep.subr.mxu0 0.0
    %344 = vmatpush1.msra.mxu0 0.0
    %345 = vmatprep.subr.mxu0 0.0
    %346 = vmatpush1.msra.mxu0 0.0
    %347 = vmatprep.subr.mxu0 0.0
    %348 = vmatpush1.msra.mxu0 0.0
    %349 = vmatprep.mubr.f32.mxu0 0.0
    %350 = vmatmul.mubr.f32.gmra.mrb[0].mxu0 %v279
    %v351 = vpop.f32.mrb[0].mxu0
    %v352 = vadd.f32 0.0, %v351
    %v353 = vpop.f32.mrb[0].mxu0
    %354 = vdwg.mxu0
    %v355 = vcvt.s32.f32 %v150
    %v357 = vsel %vm277, %v355, 0
    %359 = vmatprep.subr.mxu0 0.0
    %360 = vmatpush1.msra.mxu0 %v283
    %361 = vmatprep.subr.mxu0 0.0
    %362 = vmatpush1.msra.mxu0 0.0
    %363 = vmatprep.subr.mxu0 0.0
    %364 = vmatpush1.msra.mxu0 0.0
    %365 = vmatprep.subr.mxu0 0.0
    %366 = vmatpush1.msra.mxu0 0.0
    %367 = vmatprep.subr.mxu0 0.0
    %368 = vmatpush1.msra.mxu0 0.0
    %369 = vmatprep.subr.mxu0 0.0
    %370 = vmatpush1.msra.mxu0 0.0
    %371 = vmatprep.subr.mxu0 0.0
    %372 = vmatpush1.msra.mxu0 0.0
    %373 = vmatprep.subr.mxu0 0.0
    %374 = vmatpush1.msra.mxu0 0.0
    %375 = vmatprep.subr.mxu0 0.0
    %376 = vmatpush1.msra.mxu0 0.0
    %377 = vmatprep.subr.mxu0 0.0
    %378 = vmatpush1.msra.mxu0 0.0
    %379 = vmatprep.subr.mxu0 0.0
    %380 = vmatpush1.msra.mxu0 0.0
    %381 = vmatprep.subr.mxu0 0.0
    %382 = vmatpush1.msra.mxu0 0.0
    %383 = vmatprep.subr.mxu0 0.0
    %384 = vmatpush1.msra.mxu0 0.0
    %385 = vmatprep.subr.mxu0 0.0
    %386 = vmatpush1.msra.mxu0 0.0
    %387 = vmatprep.subr.mxu0 0.0
    %388 = vmatpush1.msra.mxu0 0.0
    %389 = vmatprep.subr.mxu0 0.0
    %390 = vmatpush1.msra.mxu0 0.0
    %391 = vmatprep.subr.mxu0 0.0
    %392 = vmatpush1.msra.mxu0 0.0
    %393 = vmatprep.subr.mxu0 0.0
    %394 = vmatpush1.msra.mxu0 0.0
    %395 = vmatprep.subr.mxu0 0.0
    %396 = vmatpush1.msra.mxu0 0.0
    %397 = vmatprep.subr.mxu0 0.0
    %398 = vmatpush1.msra.mxu0 0.0
    %399 = vmatprep.subr.mxu0 0.0
    %400 = vmatpush1.msra.mxu0 0.0
    %401 = vmatprep.subr.mxu0 0.0
    %402 = vmatpush1.msra.mxu0 0.0
    %403 = vmatprep.subr.mxu0 0.0
    %404 = vmatpush1.msra.mxu0 0.0
    %405 = vmatprep.subr.mxu0 0.0
    %406 = vmatpush1.msra.mxu0 0.0
    %407 = vmatprep.subr.mxu0 0.0
    %408 = vmatpush1.msra.mxu0 0.0
    %409 = vmatprep.subr.mxu0 0.0
    %410 = vmatpush1.msra.mxu0 0.0
    %411 = vmatprep.subr.mxu0 0.0
    %412 = vmatpush1.msra.mxu0 0.0
    %413 = vmatprep.subr.mxu0 0.0
    %414 = vmatpush1.msra.mxu0 0.0
    %415 = vmatprep.subr.mxu0 0.0
    %416 = vmatpush1.msra.mxu0 0.0
    %417 = vmatprep.subr.mxu0 0.0
    %418 = vmatpush1.msra.mxu0 0.0
    %419 = vmatprep.subr.mxu0 0.0
    %420 = vmatpush1.msra.mxu0 0.0
    %421 = vmatprep.subr.mxu0 0.0
    %422 = vmatpush1.msra.mxu0 0.0
    %423 = vmatprep.mubr.f32.mxu0 0.0
    %424 = vmatmul.mubr.f32.gmra.mrb[0].mxu0 %v357
    %v425 = vpop.f32.mrb[0].mxu0
    %v426 = vadd.f32 0.0, %v425
    %v427 = vpop.f32.mrb[0].mxu0
    %428 = vdwg.mxu0
    %v430 = vlaneseq
    %v431 = vshrl.u32 %v430, 7
    %v432 = vsub.s32 0, %v431
    %v433 = vrot.slane %v186, %v432
    %vm435 = vcmp.eq.f32.partialorder %v426, %v433
    %v436 = vsub.f32 %v352, %v148
    %v438 = vlaneseq
    %v439 = vshrl.u32 %v438, 7
    %v440 = vsub.s32 0, %v439
    %v441 = vrot.slane %v185, %v440
    %v443 = vmul.f32 %v441, %v436
    %v444 = vsel %vm435, %v443, 0.0
    %v445 = vsel %vm435, %v441, 0.0
    %v447 = vsel %vm190, %v444, 0
    %449 = vmatprep.subr.mxu0 0.0
    %450 = vmatpush1.msra.mxu0 %v187
    %451 = vmatprep.subr.mxu0 0.0
    %452 = vmatpush1.msra.mxu0 %v202
    %453 = vmatprep.subr.mxu0 0.0
    %454 = vmatpush1.msra.mxu0 0.0
    %455 = vmatprep.subr.mxu0 0.0
    %456 = vmatpush1.msra.mxu0 0.0
    %457 = vmatprep.subr.mxu0 0.0
    %458 = vmatpush1.msra.mxu0 0.0
    %459 = vmatprep.subr.mxu0 0.0
    %460 = vmatpush1.msra.mxu0 0.0
    %461 = vmatprep.subr.mxu0 0.0
    %462 = vmatpush1.msra.mxu0 0.0
    %463 = vmatprep.subr.mxu0 0.0
    %464 = vmatpush1.msra.mxu0 0.0
    %465 = vmatprep.subr.mxu0 0.0
    %466 = vmatpush1.msra.mxu0 0.0
    %467 = vmatprep.subr.mxu0 0.0
    %468 = vmatpush1.msra.mxu0 0.0
    %469 = vmatprep.subr.mxu0 0.0
    %470 = vmatpush1.msra.mxu0 0.0
    %471 = vmatprep.subr.mxu0 0.0
    %472 = vmatpush1.msra.mxu0 0.0
    %473 = vmatprep.subr.mxu0 0.0
    %474 = vmatpush1.msra.mxu0 0.0
    %475 = vmatprep.subr.mxu0 0.0
    %476 = vmatpush1.msra.mxu0 0.0
    %477 = vmatprep.subr.mxu0 0.0
    %478 = vmatpush1.msra.mxu0 0.0
    %479 = vmatprep.subr.mxu0 0.0
    %480 = vmatpush1.msra.mxu0 0.0
    %481 = vmatprep.subr.mxu0 0.0
    %482 = vmatpush1.msra.mxu0 0.0
    %483 = vmatprep.subr.mxu0 0.0
    %484 = vmatpush1.msra.mxu0 0.0
    %485 = vmatprep.subr.mxu0 0.0
    %486 = vmatpush1.msra.mxu0 0.0
    %487 = vmatprep.subr.mxu0 0.0
    %488 = vmatpush1.msra.mxu0 0.0
    %489 = vmatprep.subr.mxu0 0.0
    %490 = vmatpush1.msra.mxu0 0.0
    %491 = vmatprep.subr.mxu0 0.0
    %492 = vmatpush1.msra.mxu0 0.0
    %493 = vmatprep.subr.mxu0 0.0
    %494 = vmatpush1.msra.mxu0 0.0
    %495 = vmatprep.subr.mxu0 0.0
    %496 = vmatpush1.msra.mxu0 0.0
    %497 = vmatprep.subr.mxu0 0.0
    %498 = vmatpush1.msra.mxu0 0.0
    %499 = vmatprep.subr.mxu0 0.0
    %500 = vmatpush1.msra.mxu0 0.0
    %501 = vmatprep.subr.mxu0 0.0
    %502 = vmatpush1.msra.mxu0 0.0
    %503 = vmatprep.subr.mxu0 0.0
    %504 = vmatpush1.msra.mxu0 0.0
    %505 = vmatprep.subr.mxu0 0.0
    %506 = vmatpush1.msra.mxu0 0.0
    %507 = vmatprep.subr.mxu0 0.0
    %508 = vmatpush1.msra.mxu0 0.0
    %509 = vmatprep.subr.mxu0 0.0
    %510 = vmatpush1.msra.mxu0 0.0
    %511 = vmatprep.subr.mxu0 0.0
    %512 = vmatpush1.msra.mxu0 0.0
    %513 = vmatprep.mubr.f32.mxu0 0.0
    %514 = vmatmul.mubr.f32.gmra.mrb[0].mxu0 %v447
    %v515 = vpop.f32.mrb[0].mxu0
    %v516 = vadd.f32 0.0, %v515
    %v517 = vpop.f32.mrb[0].mxu0
    %518 = vdwg.mxu0
    %v520 = vsel %vm190, %v445, 0
    %522 = vmatprep.subr.mxu0 0.0
    %523 = vmatpush1.msra.mxu0 %v187
    %524 = vmatprep.subr.mxu0 0.0
    %525 = vmatpush1.msra.mxu0 %v202
    %526 = vmatprep.subr.mxu0 0.0
    %527 = vmatpush1.msra.mxu0 0.0
    %528 = vmatprep.subr.mxu0 0.0
    %529 = vmatpush1.msra.mxu0 0.0
    %530 = vmatprep.subr.mxu0 0.0
    %531 = vmatpush1.msra.mxu0 0.0
    %532 = vmatprep.subr.mxu0 0.0
    %533 = vmatpush1.msra.mxu0 0.0
    %534 = vmatprep.subr.mxu0 0.0
    %535 = vmatpush1.msra.mxu0 0.0
    %536 = vmatprep.subr.mxu0 0.0
    %537 = vmatpush1.msra.mxu0 0.0
    %538 = vmatprep.subr.mxu0 0.0
    %539 = vmatpush1.msra.mxu0 0.0
    %540 = vmatprep.subr.mxu0 0.0
    %541 = vmatpush1.msra.mxu0 0.0
    %542 = vmatprep.subr.mxu0 0.0
    %543 = vmatpush1.msra.mxu0 0.0
    %544 = vmatprep.subr.mxu0 0.0
    %545 = vmatpush1.msra.mxu0 0.0
    %546 = vmatprep.subr.mxu0 0.0
    %547 = vmatpush1.msra.mxu0 0.0
    %548 = vmatprep.subr.mxu0 0.0
    %549 = vmatpush1.msra.mxu0 0.0
    %550 = vmatprep.subr.mxu0 0.0
    %551 = vmatpush1.msra.mxu0 0.0
    %552 = vmatprep.subr.mxu0 0.0
    %553 = vmatpush1.msra.mxu0 0.0
    %554 = vmatprep.subr.mxu0 0.0
    %555 = vmatpush1.msra.mxu0 0.0
    %556 = vmatprep.subr.mxu0 0.0
    %557 = vmatpush1.msra.mxu0 0.0
    %558 = vmatprep.subr.mxu0 0.0
    %559 = vmatpush1.msra.mxu0 0.0
    %560 = vmatprep.subr.mxu0 0.0
    %561 = vmatpush1.msra.mxu0 0.0
    %562 = vmatprep.subr.mxu0 0.0
    %563 = vmatpush1.msra.mxu0 0.0
    %564 = vmatprep.subr.mxu0 0.0
    %565 = vmatpush1.msra.mxu0 0.0
    %566 = vmatprep.subr.mxu0 0.0
    %567 = vmatpush1.msra.mxu0 0.0
    %568 = vmatprep.subr.mxu0 0.0
    %569 = vmatpush1.msra.mxu0 0.0
    %570 = vmatprep.subr.mxu0 0.0
    %571 = vmatpush1.msra.mxu0 0.0
    %572 = vmatprep.subr.mxu0 0.0
    %573 = vmatpush1.msra.mxu0 0.0
    %574 = vmatprep.subr.mxu0 0.0
    %575 = vmatpush1.msra.mxu0 0.0
    %576 = vmatprep.subr.mxu0 0.0
    %577 = vmatpush1.msra.mxu0 0.0
    %578 = vmatprep.subr.mxu0 0.0
    %579 = vmatpush1.msra.mxu0 0.0
    %580 = vmatprep.subr.mxu0 0.0
    %581 = vmatpush1.msra.mxu0 0.0
    %582 = vmatprep.subr.mxu0 0.0
    %583 = vmatpush1.msra.mxu0 0.0
    %584 = vmatprep.subr.mxu0 0.0
    %585 = vmatpush1.msra.mxu0 0.0
    %586 = vmatprep.mubr.f32.mxu0 0.0
    %587 = vmatmul.mubr.f32.gmra.mrb[0].mxu0 %v520
    %v588 = vpop.f32.mrb[0].mxu0
    %v589 = vadd.f32 0.0, %v588
    %v590 = vpop.f32.mrb[0].mxu0
    %591 = vdwg.mxu0
    %v592 = vld [vmem:[#allocation3] sm:$0x1]
    %v593 = vsel %vm277, %v516, 0.0
    %v594 = vrot.slane %v593, 4
    %v595 = vadd.f32 %v593, %v594
    %v596 = vrot.slane %v595, 2
    %v597 = vadd.f32 %v595, %v596
    %v598 = vrot.slane %v597, 1
    %v599 = vadd.f32 %v597, %v598
    %v600 = vadd.f32 %v592, %v599
    %vm601 = vcmask 16384
    %602 = vst.msk [vmem:[#allocation3] sm:$0x1] %vm601, %v600
    %v603 = vld [vmem:[#allocation4] sm:$0x1]
    %v604 = vsel %vm277, %v589, 0.0
    %v605 = vrot.slane %v604, 4
    %v606 = vadd.f32 %v604, %v605
    %v607 = vrot.slane %v606, 2
    %v608 = vadd.f32 %v606, %v607
    %v609 = vrot.slane %v608, 1
    %v610 = vadd.f32 %v608, %v609
    %v611 = vadd.f32 %v603, %v610
    %612 = vst.msk [vmem:[#allocation4] sm:$0x1] %vm601, %v611
    // Predicated region
    $region38: #{tpu_custom_call.1} parent=1 // pred_check
      %p613 = pneg %p138
    $region39: #{tpu_custom_call.1} parent=1 // pred_check_branch
      %615 = sbr.rel (%p613) target = $region41
    $region40: #{tpu_custom_call.1} parent=1 // pred_region
      %v616 = vld [vmem:[#allocation2] sm:$0x1]
      %617 = vst.msk [vmem:[#allocation5] sm:$0x1] %vm183, %v616
      %v618 = vld [vmem:[#allocation3] sm:$0x1]
      %v620 = vlaneseq
      %v621 = vshrl.u32 %v620, 7
      %v622 = vsub.s32 0, %v621
      %v623 = vrot.slane %v618, %v622
      %624 = vrot.lane.b32.xlu0 %v623, 1
      %v625 = vpop.permute.xlu0 %624
      %vm627 = vcmask 24584
      %628 = vst.msk [vmem:[#allocation5] sm:$0x1] %vm627, %v625
      %v629 = vld [vmem:[#allocation4] sm:$0x1]
      %v631 = vlaneseq
      %v632 = vshrl.u32 %v631, 7
      %v633 = vsub.s32 0, %v632
      %v634 = vrot.slane %v629, %v633
      %635 = vrot.lane.b32.xlu0 %v634, 4
      %v636 = vpop.permute.xlu0 %635
      %vm638 = vcmask 49184
      %639 = vst.msk [vmem:[#allocation5] sm:$0x1] %vm638, %v636
    $region41: #{tpu_custom_call.1} parent=1 // pred_fallthru
      _
    // Predicated region
    $region42: #{tpu_custom_call.1} parent=1 // pred_check
      _
    $region43: #{tpu_custom_call.1} parent=1 // pred_check_branch
      %641 = sbr.rel (0) target = $region45
    $region44: #{tpu_custom_call.1} parent=1 // pred_region
      %s643 = ssub.s32 16, 16
      %644 = vsyncadd [#allocation6], %s643
      %s646 = sshll.u32 [#allocation5], 4
      %s647 = int_to_ptr.vmem [resolvable:$true] %s646
      %649 = dma.vmem_to_hbm [thread:$0]  %s647, 16, %s8, [#allocation6]
    $region45: #{tpu_custom_call.1} parent=1 // pred_fallthru
      _
    // Predicated region
    $region46: #{tpu_custom_call.1} parent=1 // pred_check
      _
    $region47: #{tpu_custom_call.1} parent=1 // pred_check_branch
      %651 = sbr.rel (0) target = $region49
    $region48: #{tpu_custom_call.1} parent=1 // pred_region
      %652 = dma.done [#allocation6], 16
    $region49: #{tpu_custom_call.1} parent=1 // pred_fallthru
      _
    %653 = vsyncpa [#allocation6], 1

</llo_original>
